<compile_context>
chip_gen: v5e
topology: v5e:2x2
jax: 0.10.0
libtpu: 0.0.40
codegen_flags: <defaults>
</compile_context>

<pallas_src>
import jax
import jax.numpy as jnp
from jax import lax
from jax.experimental import pallas as pl
from jax.experimental.pallas import tpu as pltpu

# ---- problem sizes (small, consistent with the module's forward) ----
B = 2                # batch
CIN = 4              # input channels
H = W = 16           # spatial
KH = KW = 3          # synthetic base-model conv kernel
HO = H - KH + 1      # 14
WO = W - KW + 1      # 14
NPIX = HO * WO       # 196 spatial positions per image
NP = B * NPIX        # 392 im2col columns (K-major layout)
KKC = KH * KW * CIN  # 36 im2col rows
KKC1 = KKC + 1       # +1 ones-row folds the conv bias into the matmul
FEAT = 32            # base_model.classifier[2].in_features (synthetic)
HIDDEN = 1024        # nn.Linear(in_features, 1024)
NUM_CLASSES = 15

_VMEM = pl.BlockSpec(memory_space=pltpu.MemorySpace.VMEM)


def cnn_fused_kernel(patches_ref, cw_ref, w1_ref, w2t_ref, bias_ref, out_ref):
    """Entire forward in one kernel.

    patches_ref: (KKC1, NP)        bf16  K-major im2col patches + ones row
    cw_ref:      (KKC1, FEAT)      bf16  conv weight + conv-bias row
    w1_ref:      (FEAT, HIDDEN)    bf16  fc1 weight with 1/NPIX pre-folded
    w2t_ref:     (NUM_CLASSES, HIDDEN) bf16  fc2 weight, transposed
    bias_ref:    (1, HIDDEN + NUM_CLASSES) f32  [fc1 bias | fc2 bias]
    out_ref:     (B, NUM_CLASSES)  f32  softmax probabilities
    """
    # --- synthetic base_model: conv(+bias) as one im2col matmul, ReLU, GAP ---
    acc = lax.dot_general(patches_ref[...], cw_ref[...],
                          dimension_numbers=(((0,), (0,)), ((), ())),
                          preferred_element_type=jnp.float32)       # (NP, FEAT)
    acc = jnp.maximum(acc, 0.0)                                     # ReLU, f32

    # global average pool as (B, NP) x (NP, FEAT); 0/1 block-diagonal pooling
    # matrix built in-kernel (no DMA).  1/NPIX scale is folded into w1.
    col = lax.broadcasted_iota(jnp.int32, (B, NP), 1)
    row = lax.broadcasted_iota(jnp.int32, (B, NP), 0)
    pool = ((col >= row * NPIX) & (col < (row + 1) * NPIX)).astype(jnp.bfloat16)
    feat = jnp.dot(pool, acc.astype(jnp.bfloat16),
                   preferred_element_type=jnp.float32)              # (B, FEAT) sums

    # --- fc head: Linear -> ReLU -> Dropout(eval) -> Linear -> Softmax ---
    b1 = bias_ref[:, :HIDDEN]                                       # (1, HIDDEN)
    b2 = bias_ref[:, HIDDEN:HIDDEN + NUM_CLASSES]                   # (1, NC)
    h = jnp.dot(feat.astype(jnp.bfloat16), w1_ref[...],
                preferred_element_type=jnp.float32) + b1            # (B, HIDDEN)
    h = jnp.maximum(h, 0.0)
    # TODO(synk): nn.Dropout(0.2) is identity in eval mode; train-mode masking
    # (pltpu.prng_random_bits) is not implemented here.
    logits = lax.dot_general(h.astype(jnp.bfloat16), w2t_ref[...],
                             dimension_numbers=(((1,), (1,)), ((), ())),
                             preferred_element_type=jnp.float32) + b2  # (B, NC)
    m = jnp.max(logits, axis=1, keepdims=True)
    e = jnp.exp(logits - m)
    # exact reciprocal so softmax rows sum to 1 within tight tolerance
    out_ref[...] = e * pl.reciprocal(jnp.sum(e, axis=1, keepdims=True),
                                     approx=False)


def make_params(key):
    """Weights in the layouts/dtypes the kernel consumes directly."""
    k = jax.random.split(key, 6)
    conv_w = jax.random.normal(k[0], (KH, KW, CIN, FEAT), jnp.float32) * 0.1
    conv_b = jax.random.normal(k[1], (FEAT,), jnp.float32) * 0.01
    # conv weight in im2col layout with the bias appended as the last row
    # (pairs with the ones-row appended to the patches).
    cw_aug = jnp.concatenate([conv_w.reshape(KKC, FEAT), conv_b[None, :]],
                             axis=0).astype(jnp.bfloat16)            # (KKC1, FEAT)

    fc1_w = jax.random.normal(k[2], (FEAT, HIDDEN), jnp.float32) * (1.0 / FEAT ** 0.5)
    fc1_b = jax.random.normal(k[3], (1, HIDDEN), jnp.float32) * 0.01
    # fold the exact 1/NPIX GAP scale into fc1_w (bias left unscaled)
    fc1_w_scaled = (fc1_w * (1.0 / NPIX)).astype(jnp.bfloat16)       # (FEAT, HIDDEN)

    fc2_w = jax.random.normal(k[4], (HIDDEN, NUM_CLASSES), jnp.float32) * (1.0 / HIDDEN ** 0.5)
    fc2_b = jax.random.normal(k[5], (1, NUM_CLASSES), jnp.float32) * 0.01
    fc2_wt = fc2_w.T.astype(jnp.bfloat16)                            # (NC, HIDDEN)

    bias = jnp.concatenate([fc1_b, fc2_b], axis=1)                   # (1, HIDDEN+NC) f32
    return cw_aug, fc1_w_scaled, fc2_wt, bias


def _im2col_kmajor(x_nchw):
    """(B, CIN, H, W) f32 -> (KKC1, NP) bf16 K-major patches with a ones row.
    Row order is (kh, kw, cin), matching conv_w.reshape(KKC, FEAT)."""
    slabs = []
    for kh in range(KH):
        for kw in range(KW):
            slabs.append(x_nchw[:, :, kh:kh + HO, kw:kw + WO])  # (B, CIN, Ho, Wo)
    p = jnp.stack(slabs, axis=0)                 # (KH*KW, B, CIN, Ho, Wo)
    p = jnp.transpose(p, (0, 2, 1, 3, 4))        # (KH*KW, CIN, B, Ho, Wo)
    p = p.reshape(KKC, NP)                       # K-major: 392 dim on lanes
    ones = jnp.ones((1, NP), jnp.float32)        # folds the conv bias
    return jnp.concatenate([p, ones], axis=0).astype(jnp.bfloat16)


@jax.jit
def cnn_forward(x_nchw, cw_aug, fc1_w_scaled, fc2_wt, bias):
    patches = _im2col_kmajor(x_nchw.astype(jnp.float32))
    probs = pl.pallas_call(
        cnn_fused_kernel,
        out_shape=jax.ShapeDtypeStruct((B, NUM_CLASSES), jnp.float32),
        in_specs=[_VMEM] * 5,
        out_specs=_VMEM,
        cost_estimate=pl.CostEstimate(flops=1_220_000, transcendentals=32,
                                      bytes_accessed=200_000),
    )(patches, cw_aug, fc1_w_scaled, fc2_wt, bias)
    return probs


if __name__ == "__main__":
    key = jax.random.PRNGKey(0)
    kx, kp = jax.random.split(key)
    x = jax.random.normal(kx, (B, CIN, H, W), jnp.float32)  # NCHW like PyTorch
    params = make_params(kp)

    out = cnn_forward(x, *params)
    out = jax.block_until_ready(out)

    assert out.shape == (B, NUM_CLASSES)
    # softmax rows must sum to 1 (exact reciprocal + f32 softmax path)
    assert bool(jnp.all(jnp.abs(jnp.sum(out, axis=1) - 1.0) < 1e-4))
    assert bool(jnp.all(jnp.isfinite(out)))
    print("KERNEL_OK")
</pallas_src>

<mosaic_0001>
module attributes {stable_mosaic.version = 11 : i64} {
  func.func @cnn_fused_kernel(%arg0: memref<37x392xbf16, #tpu.memory_space<vmem>>, %arg1: memref<37x32xbf16, #tpu.memory_space<vmem>>, %arg2: memref<32x1024xbf16, #tpu.memory_space<vmem>>, %arg3: memref<15x1024xbf16, #tpu.memory_space<vmem>>, %arg4: memref<1x1039xf32, #tpu.memory_space<vmem>>, %arg5: memref<2x15xf32, #tpu.memory_space<vmem>>) attributes {dimension_semantics = [], scalar_prefetch = 0 : i64, scratch_operands = 0 : i64, tpu.core_type = #tpu.core_type<tc>} {
    %c0 = arith.constant 0 : index
    %c0_0 = arith.constant 0 : index
    %0 = vector.load %arg0[%c0, %c0_0] : memref<37x392xbf16, #tpu.memory_space<vmem>>, vector<37x392xbf16>
    %c0_1 = arith.constant 0 : index
    %c0_2 = arith.constant 0 : index
    %1 = vector.load %arg1[%c0_1, %c0_2] : memref<37x32xbf16, #tpu.memory_space<vmem>>, vector<37x32xbf16>
    %cst = arith.constant dense<0.000000e+00> : vector<392x32xf32>
    %2 = tpu.matmul %0, %1, %cst {dimension_numbers = #tpu.dot_dimension_numbers<[0], [0], [1], [1], [0, 1, 1, 1], [], []>} : vector<37x392xbf16>, vector<37x32xbf16>, vector<392x32xf32> -> vector<392x32xf32>
    %cst_3 = arith.constant 0.000000e+00 : f32
    %3 = vector.broadcast %cst_3 : f32 to vector<392x32xf32>
    %4 = arith.maximumf %2, %3 : vector<392x32xf32>
    %5 = tpu.iota {dimensions = array<i32: 1>} : vector<2x392xi32>
    %6 = tpu.iota {dimensions = array<i32: 0>} : vector<2x392xi32>
    %c196_i32 = arith.constant 196 : i32
    %7 = vector.broadcast %c196_i32 : i32 to vector<2x392xi32>
    %8 = arith.muli %6, %7 : vector<2x392xi32>
    %9 = arith.cmpi sge, %5, %8 : vector<2x392xi32>
    %c1_i32 = arith.constant 1 : i32
    %10 = vector.broadcast %c1_i32 : i32 to vector<2x392xi32>
    %11 = arith.addi %6, %10 : vector<2x392xi32>
    %c196_i32_4 = arith.constant 196 : i32
    %12 = vector.broadcast %c196_i32_4 : i32 to vector<2x392xi32>
    %13 = arith.muli %11, %12 : vector<2x392xi32>
    %14 = arith.cmpi slt, %5, %13 : vector<2x392xi32>
    %15 = arith.andi %9, %14 : vector<2x392xi1>
    %16 = arith.extui %15 : vector<2x392xi1> to vector<2x392xi32>
    %17 = arith.sitofp %16 : vector<2x392xi32> to vector<2x392xf32>
    %18 = arith.truncf %17 : vector<2x392xf32> to vector<2x392xbf16>
    %19 = arith.truncf %4 : vector<392x32xf32> to vector<392x32xbf16>
    %cst_5 = arith.constant dense<0.000000e+00> : vector<2x32xf32>
    %20 = tpu.matmul %18, %19, %cst_5 {dimension_numbers = #tpu.dot_dimension_numbers<[1], [0], [0], [1], [0, 0, 1, 1], [], []>} : vector<2x392xbf16>, vector<392x32xbf16>, vector<2x32xf32> -> vector<2x32xf32>
    %c0_6 = arith.constant 0 : index
    %c0_7 = arith.constant 0 : index
    %21 = vector.load %arg4[%c0_6, %c0_7] : memref<1x1039xf32, #tpu.memory_space<vmem>>, vector<1x1024xf32>
    %c0_8 = arith.constant 0 : index
    %c1024 = arith.constant 1024 : index
    %22 = vector.load %arg4[%c0_8, %c1024] : memref<1x1039xf32, #tpu.memory_space<vmem>>, vector<1x15xf32>
    %23 = arith.truncf %20 : vector<2x32xf32> to vector<2x32xbf16>
    %c0_9 = arith.constant 0 : index
    %c0_10 = arith.constant 0 : index
    %24 = vector.load %arg2[%c0_9, %c0_10] : memref<32x1024xbf16, #tpu.memory_space<vmem>>, vector<32x1024xbf16>
    %cst_11 = arith.constant dense<0.000000e+00> : vector<2x1024xf32>
    %25 = tpu.matmul %23, %24, %cst_11 {dimension_numbers = #tpu.dot_dimension_numbers<[1], [0], [0], [1], [0, 0, 1, 1], [], []>} : vector<2x32xbf16>, vector<32x1024xbf16>, vector<2x1024xf32> -> vector<2x1024xf32>
    %26 = vector.broadcast %21 : vector<1x1024xf32> to vector<2x1024xf32>
    %27 = arith.addf %25, %26 : vector<2x1024xf32>
    %cst_12 = arith.constant 0.000000e+00 : f32
    %28 = vector.broadcast %cst_12 : f32 to vector<2x1024xf32>
    %29 = arith.maximumf %27, %28 : vector<2x1024xf32>
    %30 = arith.truncf %29 : vector<2x1024xf32> to vector<2x1024xbf16>
    %c0_13 = arith.constant 0 : index
    %c0_14 = arith.constant 0 : index
    %31 = vector.load %arg3[%c0_13, %c0_14] : memref<15x1024xbf16, #tpu.memory_space<vmem>>, vector<15x1024xbf16>
    %cst_15 = arith.constant dense<0.000000e+00> : vector<2x15xf32>
    %32 = tpu.matmul %30, %31, %cst_15 {dimension_numbers = #tpu.dot_dimension_numbers<[1], [1], [0], [0], [0, 0, 1, 0], [], []>} : vector<2x1024xbf16>, vector<15x1024xbf16>, vector<2x15xf32> -> vector<2x15xf32>
    %33 = vector.broadcast %22 : vector<1x15xf32> to vector<2x15xf32>
    %34 = arith.addf %32, %33 : vector<2x15xf32>
    %cst_16 = arith.constant dense<0xFF800000> : vector<2xf32>
    %35 = vector.multi_reduction <maximumf>, %34, %cst_16 [1] : vector<2x15xf32> to vector<2xf32>
    %36 = vector.shape_cast %35 : vector<2xf32> to vector<2x1xf32>
    %37 = vector.broadcast %36 : vector<2x1xf32> to vector<2x15xf32>
    %38 = arith.subf %34, %37 : vector<2x15xf32>
    %39 = math.exp %38 : vector<2x15xf32>
    %cst_17 = arith.constant dense<0.000000e+00> : vector<2xf32>
    %40 = vector.multi_reduction <add>, %39, %cst_17 [1] : vector<2x15xf32> to vector<2xf32>
    %41 = vector.shape_cast %40 : vector<2xf32> to vector<2x1xf32>
    %42 = tpu.reciprocal %41 : vector<2x1xf32> -> vector<2x1xf32>
    %43 = vector.broadcast %42 : vector<2x1xf32> to vector<2x15xf32>
    %44 = arith.mulf %39, %43 : vector<2x15xf32>
    %c0_18 = arith.constant 0 : index
    %c0_19 = arith.constant 0 : index
    %45 = vector.load %arg5[%c0_18, %c0_19] : memref<2x15xf32, #tpu.memory_space<vmem>>, vector<2x15xf32>
    tpu.vector_store %arg5[%c0_18, %c0_19], %44 {strides = array<i32>} : memref<2x15xf32, #tpu.memory_space<vmem>>, vector<2x15xf32>,
    return
  }
}

</mosaic_0001>

<llo_original>
// kernel: cnn_forward.1
$region0: #{cnn_forward.1}
  #allocation0 [shape = 'u32[]', space=smem, size = 0x4, offset = 0x4, fixed_abs, tag = 'smem constant byte address 0x4 - core index']
  #allocation1 [shape = 'u32[72,128]{1,0:T(1,128)}', space=vmem, size = 0x9000, scoped, tag = 'internal scratch']
  %s0 = inlined_call_operand.vmem [shape: bf16[37,392], index: 0, kind: input, shape index: {}]
  %s1 = inlined_call_operand.vmem [shape: bf16[37,32], index: 1, kind: input, shape index: {}]
  %s2 = inlined_call_operand.vmem [shape: bf16[32,1024], index: 2, kind: input, shape index: {}]
  %s3 = inlined_call_operand.vmem [shape: bf16[15,1024], index: 3, kind: input, shape index: {}]
  %s4 = inlined_call_operand.vmem [shape: f32[1,1039], index: 4, kind: input, shape index: {}]
  %s5 = inlined_call_operand.hbm [shape: f32[2,15], index: 5, kind: output, shape index: {}]
  %s6 = sld [smem:[#allocation0]]
  $region30: #{cnn_forward.1} parent=0
    _
  %s8 = ssub.s32 1, %s6
  %s9 = scalar_select 0, %s8, %s6
  $region1: #{cnn_forward.1} parent=0
    #allocation2 [shape = 'u8[1024]{0}', space=vmem, size = 0x400, scoped, tag = 'output window, operand 0, single buffered']
    #allocation3 [shape = 's32[1]{0}', space=sflag, size = 0x4, scoped, tag = 'scoped memory for cnn_forward.1']
    %10 = vsyncpa [#allocation3], 0
    // Predicated region
    $region2: #{cnn_forward.1} parent=1 // pred_check
      _
    $region3: #{cnn_forward.1} parent=1 // pred_check_branch
      %12 = sbr.rel (0) target = $region5
    $region4: #{cnn_forward.1} parent=1 // pred_region
      _
    $region5: #{cnn_forward.1} parent=1 // pred_fallthru
      _
    // Predicated region
    $region6: #{cnn_forward.1} parent=1 // pred_check
      _
    $region7: #{cnn_forward.1} parent=1 // pred_check_branch
      %14 = sbr.rel (0) target = $region9
    $region8: #{cnn_forward.1} parent=1 // pred_region
      _
    $region9: #{cnn_forward.1} parent=1 // pred_fallthru
      _
    // Predicated region
    $region10: #{cnn_forward.1} parent=1 // pred_check
      _
    $region11: #{cnn_forward.1} parent=1 // pred_check_branch
      %16 = sbr.rel (0) target = $region13
    $region12: #{cnn_forward.1} parent=1 // pred_region
      _
    $region13: #{cnn_forward.1} parent=1 // pred_fallthru
      _
    // Predicated region
    $region14: #{cnn_forward.1} parent=1 // pred_check
      _
    $region15: #{cnn_forward.1} parent=1 // pred_check_branch
      %18 = sbr.rel (0) target = $region17
    $region16: #{cnn_forward.1} parent=1 // pred_region
      _
    $region17: #{cnn_forward.1} parent=1 // pred_fallthru
      _
    // Predicated region
    $region18: #{cnn_forward.1} parent=1 // pred_check
      _
    $region19: #{cnn_forward.1} parent=1 // pred_check_branch
      %20 = sbr.rel (0) target = $region21
    $region20: #{cnn_forward.1} parent=1 // pred_region
      _
    $region21: #{cnn_forward.1} parent=1 // pred_fallthru
      _
    %v22 = vld [vmem:[%s0] sm:$0xff]
    %v23 = vld [vmem:[%s0 + $0x8] sm:$0xff]
    %v24 = vld [vmem:[%s0 + $0x10] sm:$0xff]
    %v25 = vld [vmem:[%s0 + $0x18] sm:$0xff]
    %v26 = vld [vmem:[%s0 + $0x20] sm:$0xff]
    %v27 = vld [vmem:[%s0 + $0x28] sm:$0xff]
    %v28 = vld [vmem:[%s0 + $0x30] sm:$0xff]
    %v29 = vld [vmem:[%s0 + $0x38] sm:$0xff]
    %v30 = vld [vmem:[%s0 + $0x40] sm:$0x77]
    %v31 = vld [vmem:[%s0 + $0x48] sm:$0x77]
    %v32 = vld [vmem:[%s1] sm:$0xf]
    %v33 = vld [vmem:[%s1 + $0x4] sm:$0xf]
    %v34 = vld [vmem:[%s1 + $0x8] sm:$0xf]
    %v35 = vld [vmem:[%s1 + $0xc] sm:$0xf]
    %v36 = vld [vmem:[%s1 + $0x10] sm:$0x7]
    %v47 = vunpack.c.l.b16 %v22
    %v48 = vunpack.c.h.b16 %v22
    %v49 = vunpack.c.l.b16 %v23
    %v50 = vunpack.c.h.b16 %v23
    %v51 = vunpack.c.l.b16 %v24
    %v52 = vunpack.c.h.b16 %v24
    %v53 = vunpack.c.l.b16 %v25
    %v54 = vunpack.c.h.b16 %v25
    %v55 = vunpack.c.l.b16 %v26
    %v56 = vunpack.c.h.b16 %v26
    %v57 = vunpack.c.l.b16 %v27
    %v58 = vunpack.c.h.b16 %v27
    %v59 = vunpack.c.l.b16 %v28
    %v60 = vunpack.c.h.b16 %v28
    %v61 = vunpack.c.l.b16 %v29
    %v62 = vunpack.c.h.b16 %v29
    %v63 = vunpack.c.l.b16 %v30
    %v64 = vunpack.c.h.b16 %v30
    %v65 = vunpack.c.l.b16 %v31
    %v66 = vunpack.c.h.b16 %v31
    %v67 = vpack.c.b16 %v51, %v47
    %v68 = vpack.c.b16 %v52, %v48
    %v69 = vpack.c.b16 %v53, %v49
    %v70 = vpack.c.b16 %v54, %v50
    %v71 = vpack.c.b16 %v59, %v55
    %v72 = vpack.c.b16 %v60, %v56
    %v73 = vpack.c.b16 %v61, %v57
    %v74 = vpack.c.b16 %v62, %v58
    %v75 = vpack.c.b16 %v63, %v63
    %v76 = vpack.c.b16 %v64, %v64
    %v77 = vpack.c.b16 %v65, %v65
    %v78 = vpack.c.b16 %v66, %v66
    %91 = vxpose.binary.xlu0.c.b16.start [1/16] %v68, %v67, 128
    %92 = vxpose.binary.xlu0.c.b16.cont [2/16] %v72, %v71, 128
    %93 = vxpose.binary.xlu0.c.b16.cont [3/16] %v76, %v75, 128
    %94 = vxpose.binary.xlu0.c.b16.cont [4/16] 0, 0, 128
    %95 = vxpose.binary.xlu0.c.b16.cont [5/16] 0, 0, 128
    %96 = vxpose.binary.xlu0.c.b16.cont [6/16] 0, 0, 128
    %97 = vxpose.binary.xlu0.c.b16.cont [7/16] 0, 0, 128
    %98 = vxpose.binary.xlu0.c.b16.end [8/16] 0, 0, 128
    %v99 = vpop.trf.xlu0
    %v100 = vpop.trf.xlu0
    %v101 = vpop.trf.xlu0
    %v102 = vpop.trf.xlu0
    %v103 = vpop.trf.xlu0
    %v104 = vpop.trf.xlu0
    %v105 = vpop.trf.xlu0
    %v106 = vpop.trf.xlu0
    %v107 = vpop.trf.xlu0
    %v108 = vpop.trf.xlu0
    %v109 = vpop.trf.xlu0
    %v110 = vpop.trf.xlu0
    %v111 = vpop.trf.xlu0
    %v112 = vpop.trf.xlu0
    %v113 = vpop.trf.xlu0
    %v114 = vpop.trf.xlu0
    %115 = vxpose.binary.xlu0.c.b16.start [1/16] %v70, %v69, 128
    %116 = vxpose.binary.xlu0.c.b16.cont [2/16] %v74, %v73, 128
    %117 = vxpose.binary.xlu0.c.b16.cont [3/16] %v78, %v77, 128
    %118 = vxpose.binary.xlu0.c.b16.cont [4/16] 0, 0, 128
    %119 = vxpose.binary.xlu0.c.b16.cont [5/16] 0, 0, 128
    %120 = vxpose.binary.xlu0.c.b16.cont [6/16] 0, 0, 128
    %121 = vxpose.binary.xlu0.c.b16.cont [7/16] 0, 0, 128
    %122 = vxpose.binary.xlu0.c.b16.end [8/16] 0, 0, 128
    %v123 = vpop.trf.xlu0
    %v124 = vpop.trf.xlu0
    %v125 = vpop.trf.xlu0
    %v126 = vpop.trf.xlu0
    %v127 = vpop.trf.xlu0
    %v128 = vpop.trf.xlu0
    %v129 = vpop.trf.xlu0
    %v130 = vpop.trf.xlu0
    %v131 = vpop.trf.xlu0
    %v132 = vpop.trf.xlu0
    %v133 = vpop.trf.xlu0
    %v134 = vpop.trf.xlu0
    %v135 = vpop.trf.xlu0
    %v136 = vpop.trf.xlu0
    %v137 = vpop.trf.xlu0
    %v138 = vpop.trf.xlu0
    %v144 = vunpack.c.l.b16 %v32
    %v145 = vunpack.c.l.b16 %v33
    %v146 = vunpack.c.l.b16 %v34
    %v147 = vunpack.c.l.b16 %v35
    %v148 = vunpack.c.l.b16 %v36
    %v149 = vpack.c.b16 %v145, %v144
    %v150 = vpack.c.b16 %v147, %v146
    %v151 = vpack.c.b16 %v148, %v148
    %vm154 = vcmask 302080
    %v156 = vsel %vm154, %v99, 0
    %v159 = vsel %vm154, %v101, 0
    %v162 = vsel %vm154, %v103, 0
    %v165 = vsel %vm154, %v105, 0
    %v168 = vsel %vm154, %v107, 0
    %v171 = vsel %vm154, %v109, 0
    %v174 = vsel %vm154, %v111, 0
    %v177 = vsel %vm154, %v113, 0
    %v180 = vsel %vm154, %v100, 0
    %v183 = vsel %vm154, %v102, 0
    %v186 = vsel %vm154, %v104, 0
    %v189 = vsel %vm154, %v106, 0
    %v192 = vsel %vm154, %v108, 0
    %v195 = vsel %vm154, %v110, 0
    %v198 = vsel %vm154, %v112, 0
    %v201 = vsel %vm154, %v114, 0
    %v204 = vsel %vm154, %v123, 0
    %v207 = vsel %vm154, %v125, 0
    %v210 = vsel %vm154, %v127, 0
    %v213 = vsel %vm154, %v129, 0
    %v216 = vsel %vm154, %v131, 0
    %v219 = vsel %vm154, %v133, 0
    %v222 = vsel %vm154, %v135, 0
    %v225 = vsel %vm154, %v137, 0
    %v228 = vsel %vm154, %v124, 0
    %vm230 = vcmask 1041408
    %vm231 = vcmask 1042432
    %v232 = vsel %vm230, 4294967295, 65535
    %v233 = vsel %vm231, %v232, 0
    %v235 = vand.u32 %v151, %v233
    %237 = vmatpush.bf16.msra.mxu0 0
    %238 = vmatpush.bf16.msra.mxu0 0
    %239 = vmatpush.bf16.msra.mxu0 0
    %240 = vmatpush.bf16.msra.mxu0 0
    %241 = vmatpush.bf16.msra.mxu0 0
    %242 = vmatpush.bf16.msra.mxu0 %v235
    %243 = vmatpush.bf16.msra.mxu0 %v150
    %244 = vmatpush.bf16.msra.mxu0 %v149
    %245 = vmatmul.bf16.gmra.mxu0 %v156
    %v246 = vpop.f32.mrf.mxu0
    %v247 = vadd.f32 0.0, %v246
    %v248 = vpop.f32.mrf.mxu0
    %v249 = vadd.f32 0.0, %v248
    %250 = vmatmul.bf16.gmra.mxu0 %v159
    %v251 = vpop.f32.mrf.mxu0
    %v252 = vadd.f32 0.0, %v251
    %v253 = vpop.f32.mrf.mxu0
    %v254 = vadd.f32 0.0, %v253
    %255 = vmatmul.bf16.gmra.mxu0 %v162
    %v256 = vpop.f32.mrf.mxu0
    %v257 = vadd.f32 0.0, %v256
    %v258 = vpop.f32.mrf.mxu0
    %v259 = vadd.f32 0.0, %v258
    %260 = vmatmul.bf16.gmra.mxu0 %v165
    %v261 = vpop.f32.mrf.mxu0
    %v262 = vadd.f32 0.0, %v261
    %v263 = vpop.f32.mrf.mxu0
    %v264 = vadd.f32 0.0, %v263
    %265 = vmatmul.bf16.gmra.mxu0 %v168
    %v266 = vpop.f32.mrf.mxu0
    %v267 = vadd.f32 0.0, %v266
    %v268 = vpop.f32.mrf.mxu0
    %v269 = vadd.f32 0.0, %v268
    %270 = vmatmul.bf16.gmra.mxu0 %v171
    %v271 = vpop.f32.mrf.mxu0
    %v272 = vadd.f32 0.0, %v271
    %v273 = vpop.f32.mrf.mxu0
    %v274 = vadd.f32 0.0, %v273
    %275 = vmatmul.bf16.gmra.mxu0 %v174
    %v276 = vpop.f32.mrf.mxu0
    %v277 = vadd.f32 0.0, %v276
    %v278 = vpop.f32.mrf.mxu0
    %v279 = vadd.f32 0.0, %v278
    %280 = vmatmul.bf16.gmra.mxu0 %v177
    %v281 = vpop.f32.mrf.mxu0
    %v282 = vadd.f32 0.0, %v281
    %v283 = vpop.f32.mrf.mxu0
    %v284 = vadd.f32 0.0, %v283
    %285 = vmatmul.bf16.gmra.mxu0 %v180
    %v286 = vpop.f32.mrf.mxu0
    %v287 = vadd.f32 0.0, %v286
    %v288 = vpop.f32.mrf.mxu0
    %v289 = vadd.f32 0.0, %v288
    %290 = vmatmul.bf16.gmra.mxu0 %v183
    %v291 = vpop.f32.mrf.mxu0
    %v292 = vadd.f32 0.0, %v291
    %v293 = vpop.f32.mrf.mxu0
    %v294 = vadd.f32 0.0, %v293
    %295 = vmatmul.bf16.gmra.mxu0 %v186
    %v296 = vpop.f32.mrf.mxu0
    %v297 = vadd.f32 0.0, %v296
    %v298 = vpop.f32.mrf.mxu0
    %v299 = vadd.f32 0.0, %v298
    %300 = vmatmul.bf16.gmra.mxu0 %v189
    %v301 = vpop.f32.mrf.mxu0
    %v302 = vadd.f32 0.0, %v301
    %v303 = vpop.f32.mrf.mxu0
    %v304 = vadd.f32 0.0, %v303
    %305 = vmatmul.bf16.gmra.mxu0 %v192
    %v306 = vpop.f32.mrf.mxu0
    %v307 = vadd.f32 0.0, %v306
    %v308 = vpop.f32.mrf.mxu0
    %v309 = vadd.f32 0.0, %v308
    %310 = vmatmul.bf16.gmra.mxu0 %v195
    %v311 = vpop.f32.mrf.mxu0
    %v312 = vadd.f32 0.0, %v311
    %v313 = vpop.f32.mrf.mxu0
    %v314 = vadd.f32 0.0, %v313
    %315 = vmatmul.bf16.gmra.mxu0 %v198
    %v316 = vpop.f32.mrf.mxu0
    %v317 = vadd.f32 0.0, %v316
    %v318 = vpop.f32.mrf.mxu0
    %v319 = vadd.f32 0.0, %v318
    %320 = vmatmul.bf16.gmra.mxu0 %v201
    %v321 = vpop.f32.mrf.mxu0
    %v322 = vadd.f32 0.0, %v321
    %v323 = vpop.f32.mrf.mxu0
    %v324 = vadd.f32 0.0, %v323
    %325 = vmatmul.bf16.gmra.mxu0 %v204
    %v326 = vpop.f32.mrf.mxu0
    %v327 = vadd.f32 0.0, %v326
    %v328 = vpop.f32.mrf.mxu0
    %v329 = vadd.f32 0.0, %v328
    %330 = vmatmul.bf16.gmra.mxu0 %v207
    %v331 = vpop.f32.mrf.mxu0
    %v332 = vadd.f32 0.0, %v331
    %v333 = vpop.f32.mrf.mxu0
    %v334 = vadd.f32 0.0, %v333
    %335 = vmatmul.bf16.gmra.mxu0 %v210
    %v336 = vpop.f32.mrf.mxu0
    %v337 = vadd.f32 0.0, %v336
    %v338 = vpop.f32.mrf.mxu0
    %v339 = vadd.f32 0.0, %v338
    %340 = vmatmul.bf16.gmra.mxu0 %v213
    %v341 = vpop.f32.mrf.mxu0
    %v342 = vadd.f32 0.0, %v341
    %v343 = vpop.f32.mrf.mxu0
    %v344 = vadd.f32 0.0, %v343
    %345 = vmatmul.bf16.gmra.mxu0 %v216
    %v346 = vpop.f32.mrf.mxu0
    %v347 = vadd.f32 0.0, %v346
    %v348 = vpop.f32.mrf.mxu0
    %v349 = vadd.f32 0.0, %v348
    %350 = vmatmul.bf16.gmra.mxu0 %v219
    %v351 = vpop.f32.mrf.mxu0
    %v352 = vadd.f32 0.0, %v351
    %v353 = vpop.f32.mrf.mxu0
    %v354 = vadd.f32 0.0, %v353
    %355 = vmatmul.bf16.gmra.mxu0 %v222
    %v356 = vpop.f32.mrf.mxu0
    %v357 = vadd.f32 0.0, %v356
    %v358 = vpop.f32.mrf.mxu0
    %v359 = vadd.f32 0.0, %v358
    %360 = vmatmul.bf16.gmra.mxu0 %v225
    %v361 = vpop.f32.mrf.mxu0
    %v362 = vadd.f32 0.0, %v361
    %v363 = vpop.f32.mrf.mxu0
    %v364 = vadd.f32 0.0, %v363
    %365 = vmatmul.bf16.gmra.mxu0 %v228
    %v366 = vpop.f32.mrf.mxu0
    %v367 = vadd.f32 0.0, %v366
    %v368 = vpop.f32.mrf.mxu0
    %369 = vdwg.mxu0
    %v370 = vmax.f32 %v247, 0.0
    %v371 = vmax.f32 %v249, 0.0
    %v372 = vmax.f32 %v252, 0.0
    %v373 = vmax.f32 %v254, 0.0
    %v374 = vmax.f32 %v257, 0.0
    %v375 = vmax.f32 %v259, 0.0
    %v376 = vmax.f32 %v262, 0.0
    %v377 = vmax.f32 %v264, 0.0
    %v378 = vmax.f32 %v267, 0.0
    %v379 = vmax.f32 %v269, 0.0
    %v380 = vmax.f32 %v272, 0.0
    %v381 = vmax.f32 %v274, 0.0
    %v382 = vmax.f32 %v277, 0.0
    %v383 = vmax.f32 %v279, 0.0
    %v384 = vmax.f32 %v282, 0.0
    %v385 = vmax.f32 %v284, 0.0
    %v386 = vmax.f32 %v287, 0.0
    %v387 = vmax.f32 %v289, 0.0
    %v388 = vmax.f32 %v292, 0.0
    %v389 = vmax.f32 %v294, 0.0
    %v390 = vmax.f32 %v297, 0.0
    %v391 = vmax.f32 %v299, 0.0
    %v392 = vmax.f32 %v302, 0.0
    %v393 = vmax.f32 %v304, 0.0
    %v394 = vmax.f32 %v307, 0.0
    %v395 = vmax.f32 %v309, 0.0
    %v396 = vmax.f32 %v312, 0.0
    %v397 = vmax.f32 %v314, 0.0
    %v398 = vmax.f32 %v317, 0.0
    %v399 = vmax.f32 %v319, 0.0
    %v400 = vmax.f32 %v322, 0.0
    %v401 = vmax.f32 %v324, 0.0
    %v402 = vmax.f32 %v327, 0.0
    %v403 = vmax.f32 %v329, 0.0
    %v404 = vmax.f32 %v332, 0.0
    %v405 = vmax.f32 %v334, 0.0
    %v406 = vmax.f32 %v337, 0.0
    %v407 = vmax.f32 %v339, 0.0
    %v408 = vmax.f32 %v342, 0.0
    %v409 = vmax.f32 %v344, 0.0
    %v410 = vmax.f32 %v347, 0.0
    %v411 = vmax.f32 %v349, 0.0
    %v412 = vmax.f32 %v352, 0.0
    %v413 = vmax.f32 %v354, 0.0
    %v414 = vmax.f32 %v357, 0.0
    %v415 = vmax.f32 %v359, 0.0
    %v416 = vmax.f32 %v362, 0.0
    %v417 = vmax.f32 %v364, 0.0
    %v418 = vmax.f32 %v367, 0.0
    %v419 = vlaneseq
    %v420 = vand.u32 %v419, 127
    %v421 = vadd.s32 %v420, 128
    %v422 = vadd.s32 %v420, 256
    %v423 = vadd.s32 %v420, 384
    %v424 = vlaneseq
    %v425 = vshrl.u32 %v424, 7
    %v426 = vmul.u32 %v425, 196
    %vm427 = vcmp.ge.s32.totalorder %v420, %v426
    %vm428 = vcmp.ge.s32.totalorder %v421, %v426
    %vm429 = vcmp.ge.s32.totalorder %v422, %v426
    %vm430 = vcmp.ge.s32.totalorder %v423, %v426
    %v431 = vadd.s32 %v425, 1
    %v432 = vmul.u32 %v431, 196
    %vm433 = vcmp.lt.s32.totalorder %v420, %v432
    %vm434 = vcmp.lt.s32.totalorder %v421, %v432
    %vm435 = vcmp.lt.s32.totalorder %v422, %v432
    %vm436 = vcmp.lt.s32.totalorder %v423, %v432
    %vm437 = vmand %vm427, %vm433
    %vm438 = vmand %vm428, %vm434
    %vm439 = vmand %vm429, %vm435
    %vm440 = vmand %vm430, %vm436
    %v441 = vsel %vm437, 1, 0
    %v442 = vsel %vm438, 1, 0
    %v443 = vsel %vm439, 1, 0
    %v444 = vsel %vm440, 1, 0
    %v445 = vcvt.s32.f32 %v441
    %v446 = vcvt.s32.f32 %v442
    %v447 = vcvt.s32.f32 %v443
    %v448 = vcvt.s32.f32 %v444
    %v449 = vpack.c.bf16 %v445, %v445
    %v450 = vpack.c.bf16 %v446, %v446
    %v451 = vpack.c.bf16 %v447, %v447
    %v452 = vpack.c.bf16 %v448, %v448
    %v453 = vpack.c.bf16 %v371, %v370
    %v454 = vpack.c.bf16 %v373, %v372
    %v455 = vpack.c.bf16 %v375, %v374
    %v456 = vpack.c.bf16 %v377, %v376
    %v457 = vpack.c.bf16 %v379, %v378
    %v458 = vpack.c.bf16 %v381, %v380
    %v459 = vpack.c.bf16 %v383, %v382
    %v460 = vpack.c.bf16 %v385, %v384
    %v461 = vpack.c.bf16 %v387, %v386
    %v462 = vpack.c.bf16 %v389, %v388
    %v463 = vpack.c.bf16 %v391, %v390
    %v464 = vpack.c.bf16 %v393, %v392
    %v465 = vpack.c.bf16 %v395, %v394
    %v466 = vpack.c.bf16 %v397, %v396
    %v467 = vpack.c.bf16 %v399, %v398
    %v468 = vpack.c.bf16 %v401, %v400
    %v469 = vpack.c.bf16 %v403, %v402
    %v470 = vpack.c.bf16 %v405, %v404
    %v471 = vpack.c.bf16 %v407, %v406
    %v472 = vpack.c.bf16 %v409, %v408
    %v473 = vpack.c.bf16 %v411, %v410
    %v474 = vpack.c.bf16 %v413, %v412
    %v475 = vpack.c.bf16 %v415, %v414
    %v476 = vpack.c.bf16 %v417, %v416
    %v477 = vpack.c.bf16 %v418, %v418
    %vm478 = vcmask 64512
    %v480 = vsel %vm478, %v452, 0
    %vm482 = vcmask 1043456
    %v484 = vsel %vm482, %v477, 0
    %486 = vmatpush.bf16.msra.mxu0 %v460
    %487 = vmatpush.bf16.msra.mxu0 %v459
    %488 = vmatpush.bf16.msra.mxu0 %v458
    %489 = vmatpush.bf16.msra.mxu0 %v457
    %490 = vmatpush.bf16.msra.mxu0 %v456
    %491 = vmatpush.bf16.msra.mxu0 %v455
    %492 = vmatpush.bf16.msra.mxu0 %v454
    %493 = vmatpush.bf16.msra.mxu0 %v453
    %494 = vmatmul.bf16.gmra.mxu0 %v449
    %v495 = vpop.f32.mrf.mxu0
    %v496 = vadd.f32 0.0, %v495
    %v497 = vpop.f32.mrf.mxu0
    %498 = vdwg.mxu0
    %499 = vmatpush.bf16.msra.mxu0 %v468
    %500 = vmatpush.bf16.msra.mxu0 %v467
    %501 = vmatpush.bf16.msra.mxu0 %v466
    %502 = vmatpush.bf16.msra.mxu0 %v465
    %503 = vmatpush.bf16.msra.mxu0 %v464
    %504 = vmatpush.bf16.msra.mxu0 %v463
    %505 = vmatpush.bf16.msra.mxu0 %v462
    %506 = vmatpush.bf16.msra.mxu0 %v461
    %507 = vmatmul.bf16.gmra.mxu0 %v450
    %v508 = vpop.f32.mrf.mxu0
    %v509 = vadd.f32 %v496, %v508
    %v510 = vpop.f32.mrf.mxu0
    %511 = vdwg.mxu0
    %512 = vmatpush.bf16.msra.mxu0 %v476
    %513 = vmatpush.bf16.msra.mxu0 %v475
    %514 = vmatpush.bf16.msra.mxu0 %v474
    %515 = vmatpush.bf16.msra.mxu0 %v473
    %516 = vmatpush.bf16.msra.mxu0 %v472
    %517 = vmatpush.bf16.msra.mxu0 %v471
    %518 = vmatpush.bf16.msra.mxu0 %v470
    %519 = vmatpush.bf16.msra.mxu0 %v469
    %520 = vmatmul.bf16.gmra.mxu0 %v451
    %v521 = vpop.f32.mrf.mxu0
    %v522 = vadd.f32 %v509, %v521
    %v523 = vpop.f32.mrf.mxu0
    %524 = vdwg.mxu0
    %525 = vmatpush.bf16.msra.mxu0 0
    %526 = vmatpush.bf16.msra.mxu0 0
    %527 = vmatpush.bf16.msra.mxu0 0
    %528 = vmatpush.bf16.msra.mxu0 0
    %529 = vmatpush.bf16.msra.mxu0 0
    %530 = vmatpush.bf16.msra.mxu0 0
    %531 = vmatpush.bf16.msra.mxu0 0
    %532 = vmatpush.bf16.msra.mxu0 %v484
    %533 = vmatmul.bf16.gmra.mxu0 %v480
    %v534 = vpop.f32.mrf.mxu0
    %v535 = vadd.f32 %v522, %v534
    %v536 = vpop.f32.mrf.mxu0
    %537 = vdwg.mxu0
    %v538 = vld [vmem:[%s4] sm:$0xff]
    %v539 = vld [vmem:[%s4 + $0x8] sm:$0x1]
    %v540 = vpack.c.bf16 %v535, %v535
    %v541 = vld [vmem:[%s2] sm:$0xff]
    %v542 = vld [vmem:[%s2 + $0x8] sm:$0xff]
    %v543 = vld [vmem:[%s2 + $0x10] sm:$0xff]
    %v544 = vld [vmem:[%s2 + $0x18] sm:$0xff]
    %v545 = vld [vmem:[%s2 + $0x20] sm:$0xff]
    %v546 = vld [vmem:[%s2 + $0x28] sm:$0xff]
    %v547 = vld [vmem:[%s2 + $0x30] sm:$0xff]
    %v548 = vld [vmem:[%s2 + $0x38] sm:$0xff]
    %v549 = vld [vmem:[%s2 + $0x40] sm:$0xff]
    %v550 = vld [vmem:[%s2 + $0x48] sm:$0xff]
    %v551 = vld [vmem:[%s2 + $0x50] sm:$0xff]
    %v552 = vld [vmem:[%s2 + $0x58] sm:$0xff]
    %v553 = vld [vmem:[%s2 + $0x60] sm:$0xff]
    %v554 = vld [vmem:[%s2 + $0x68] sm:$0xff]
    %v555 = vld [vmem:[%s2 + $0x70] sm:$0xff]
    %v556 = vld [vmem:[%s2 + $0x78] sm:$0xff]
    %v558 = vperm.slane %v538, 0
    %v559 = vperm.slane %v538, 1
    %v560 = vperm.slane %v538, 2
    %v561 = vperm.slane %v538, 3
    %v562 = vperm.slane %v538, 4
    %v563 = vperm.slane %v538, 5
    %v564 = vperm.slane %v538, 6
    %v565 = vperm.slane %v538, 7
    %v590 = vunpack.c.l.b16 %v541
    %v591 = vunpack.c.h.b16 %v541
    %v592 = vunpack.c.l.b16 %v542
    %v593 = vunpack.c.h.b16 %v542
    %v594 = vunpack.c.l.b16 %v543
    %v595 = vunpack.c.h.b16 %v543
    %v596 = vunpack.c.l.b16 %v544
    %v597 = vunpack.c.h.b16 %v544
    %v598 = vunpack.c.l.b16 %v545
    %v599 = vunpack.c.h.b16 %v545
    %v600 = vunpack.c.l.b16 %v546
    %v601 = vunpack.c.h.b16 %v546
    %v602 = vunpack.c.l.b16 %v547
    %v603 = vunpack.c.h.b16 %v547
    %v604 = vunpack.c.l.b16 %v548
    %v605 = vunpack.c.h.b16 %v548
    %v606 = vunpack.c.l.b16 %v549
    %v607 = vunpack.c.h.b16 %v549
    %v608 = vunpack.c.l.b16 %v550
    %v609 = vunpack.c.h.b16 %v550
    %v610 = vunpack.c.l.b16 %v551
    %v611 = vunpack.c.h.b16 %v551
    %v612 = vunpack.c.l.b16 %v552
    %v613 = vunpack.c.h.b16 %v552
    %v614 = vunpack.c.l.b16 %v553
    %v615 = vunpack.c.h.b16 %v553
    %v616 = vunpack.c.l.b16 %v554
    %v617 = vunpack.c.h.b16 %v554
    %v618 = vunpack.c.l.b16 %v555
    %v619 = vunpack.c.h.b16 %v555
    %v620 = vunpack.c.l.b16 %v556
    %v621 = vunpack.c.h.b16 %v556
    %v622 = vpack.c.b16 %v598, %v590
    %v623 = vpack.c.b16 %v599, %v591
    %v624 = vpack.c.b16 %v600, %v592
    %v625 = vpack.c.b16 %v601, %v593
    %v626 = vpack.c.b16 %v602, %v594
    %v627 = vpack.c.b16 %v603, %v595
    %v628 = vpack.c.b16 %v604, %v596
    %v629 = vpack.c.b16 %v605, %v597
    %v630 = vpack.c.b16 %v614, %v606
    %v631 = vpack.c.b16 %v615, %v607
    %v632 = vpack.c.b16 %v616, %v608
    %v633 = vpack.c.b16 %v617, %v609
    %v634 = vpack.c.b16 %v618, %v610
    %v635 = vpack.c.b16 %v619, %v611
    %v636 = vpack.c.b16 %v620, %v612
    %v637 = vpack.c.b16 %v621, %v613
    %vm654 = vcmask 261120
    %v656 = vsel %vm654, %v540, 0
    %658 = vmatpush.bf16.msra.mxu0 0
    %659 = vmatpush.bf16.msra.mxu0 0
    %660 = vmatpush.bf16.msra.mxu0 0
    %661 = vmatpush.bf16.msra.mxu0 0
    %662 = vmatpush.bf16.msra.mxu0 0
    %663 = vmatpush.bf16.msra.mxu0 0
    %664 = vmatpush.bf16.msra.mxu0 %v630
    %665 = vmatpush.bf16.msra.mxu0 %v622
    %666 = vmatmul.bf16.gmra.mxu0 %v656
    %v667 = vpop.f32.mrf.mxu0
    %v668 = vadd.f32 %v558, %v667
    %v669 = vpop.f32.mrf.mxu0
    %670 = vdwg.mxu0
    %671 = vmatpush.bf16.msra.mxu0 0
    %672 = vmatpush.bf16.msra.mxu0 0
    %673 = vmatpush.bf16.msra.mxu0 0
    %674 = vmatpush.bf16.msra.mxu0 0
    %675 = vmatpush.bf16.msra.mxu0 0
    %676 = vmatpush.bf16.msra.mxu0 0
    %677 = vmatpush.bf16.msra.mxu0 %v631
    %678 = vmatpush.bf16.msra.mxu0 %v623
    %679 = vmatmul.bf16.gmra.mxu0 %v656
    %v680 = vpop.f32.mrf.mxu0
    %v681 = vadd.f32 %v559, %v680
    %v682 = vpop.f32.mrf.mxu0
    %683 = vdwg.mxu0
    %684 = vmatpush.bf16.msra.mxu0 0
    %685 = vmatpush.bf16.msra.mxu0 0
    %686 = vmatpush.bf16.msra.mxu0 0
    %687 = vmatpush.bf16.msra.mxu0 0
    %688 = vmatpush.bf16.msra.mxu0 0
    %689 = vmatpush.bf16.msra.mxu0 0
    %690 = vmatpush.bf16.msra.mxu0 %v632
    %691 = vmatpush.bf16.msra.mxu0 %v624
    %692 = vmatmul.bf16.gmra.mxu0 %v656
    %v693 = vpop.f32.mrf.mxu0
    %v694 = vadd.f32 %v560, %v693
    %v695 = vpop.f32.mrf.mxu0
    %696 = vdwg.mxu0
    %697 = vmatpush.bf16.msra.mxu0 0
    %698 = vmatpush.bf16.msra.mxu0 0
    %699 = vmatpush.bf16.msra.mxu0 0
    %700 = vmatpush.bf16.msra.mxu0 0
    %701 = vmatpush.bf16.msra.mxu0 0
    %702 = vmatpush.bf16.msra.mxu0 0
    %703 = vmatpush.bf16.msra.mxu0 %v633
    %704 = vmatpush.bf16.msra.mxu0 %v625
    %705 = vmatmul.bf16.gmra.mxu0 %v656
    %v706 = vpop.f32.mrf.mxu0
    %v707 = vadd.f32 %v561, %v706
    %v708 = vpop.f32.mrf.mxu0
    %709 = vdwg.mxu0
    %710 = vmatpush.bf16.msra.mxu0 0
    %711 = vmatpush.bf16.msra.mxu0 0
    %712 = vmatpush.bf16.msra.mxu0 0
    %713 = vmatpush.bf16.msra.mxu0 0
    %714 = vmatpush.bf16.msra.mxu0 0
    %715 = vmatpush.bf16.msra.mxu0 0
    %716 = vmatpush.bf16.msra.mxu0 %v634
    %717 = vmatpush.bf16.msra.mxu0 %v626
    %718 = vmatmul.bf16.gmra.mxu0 %v656
    %v719 = vpop.f32.mrf.mxu0
    %v720 = vadd.f32 %v562, %v719
    %v721 = vpop.f32.mrf.mxu0
    %722 = vdwg.mxu0
    %723 = vmatpush.bf16.msra.mxu0 0
    %724 = vmatpush.bf16.msra.mxu0 0
    %725 = vmatpush.bf16.msra.mxu0 0
    %726 = vmatpush.bf16.msra.mxu0 0
    %727 = vmatpush.bf16.msra.mxu0 0
    %728 = vmatpush.bf16.msra.mxu0 0
    %729 = vmatpush.bf16.msra.mxu0 %v635
    %730 = vmatpush.bf16.msra.mxu0 %v627
    %731 = vmatmul.bf16.gmra.mxu0 %v656
    %v732 = vpop.f32.mrf.mxu0
    %v733 = vadd.f32 %v563, %v732
    %v734 = vpop.f32.mrf.mxu0
    %735 = vdwg.mxu0
    %736 = vmatpush.bf16.msra.mxu0 0
    %737 = vmatpush.bf16.msra.mxu0 0
    %738 = vmatpush.bf16.msra.mxu0 0
    %739 = vmatpush.bf16.msra.mxu0 0
    %740 = vmatpush.bf16.msra.mxu0 0
    %741 = vmatpush.bf16.msra.mxu0 0
    %742 = vmatpush.bf16.msra.mxu0 %v636
    %743 = vmatpush.bf16.msra.mxu0 %v628
    %744 = vmatmul.bf16.gmra.mxu0 %v656
    %v745 = vpop.f32.mrf.mxu0
    %v746 = vadd.f32 %v564, %v745
    %v747 = vpop.f32.mrf.mxu0
    %748 = vdwg.mxu0
    %749 = vmatpush.bf16.msra.mxu0 0
    %750 = vmatpush.bf16.msra.mxu0 0
    %751 = vmatpush.bf16.msra.mxu0 0
    %752 = vmatpush.bf16.msra.mxu0 0
    %753 = vmatpush.bf16.msra.mxu0 0
    %754 = vmatpush.bf16.msra.mxu0 0
    %755 = vmatpush.bf16.msra.mxu0 %v637
    %756 = vmatpush.bf16.msra.mxu0 %v629
    %757 = vmatmul.bf16.gmra.mxu0 %v656
    %v758 = vpop.f32.mrf.mxu0
    %v759 = vadd.f32 %v565, %v758
    %v760 = vpop.f32.mrf.mxu0
    %761 = vdwg.mxu0
    %v762 = vmax.f32 %v668, 0.0
    %v763 = vmax.f32 %v681, 0.0
    %v764 = vmax.f32 %v694, 0.0
    %v765 = vmax.f32 %v707, 0.0
    %v766 = vmax.f32 %v720, 0.0
    %v767 = vmax.f32 %v733, 0.0
    %v768 = vmax.f32 %v746, 0.0
    %v769 = vmax.f32 %v759, 0.0
    %v770 = vpack.c.bf16 %v762, %v762
    %v771 = vpack.c.bf16 %v763, %v763
    %v772 = vpack.c.bf16 %v764, %v764
    %v773 = vpack.c.bf16 %v765, %v765
    %v774 = vpack.c.bf16 %v766, %v766
    %v775 = vpack.c.bf16 %v767, %v767
    %v776 = vpack.c.bf16 %v768, %v768
    %v777 = vpack.c.bf16 %v769, %v769
    %v778 = vld [vmem:[%s3] sm:$0xff]
    %v779 = vld [vmem:[%s3 + $0x8] sm:$0xff]
    %v780 = vld [vmem:[%s3 + $0x10] sm:$0xff]
    %v781 = vld [vmem:[%s3 + $0x18] sm:$0xff]
    %v782 = vld [vmem:[%s3 + $0x20] sm:$0xff]
    %v783 = vld [vmem:[%s3 + $0x28] sm:$0xff]
    %v784 = vld [vmem:[%s3 + $0x30] sm:$0xff]
    %v785 = vld [vmem:[%s3 + $0x38] sm:$0xff]
    %v787 = vperm.slane %v539, 0
    %v797 = vunpack.c.l.b16 %v778
    %v798 = vunpack.c.h.b16 %v778
    %v799 = vunpack.c.l.b16 %v779
    %v800 = vunpack.c.h.b16 %v779
    %v801 = vunpack.c.l.b16 %v780
    %v802 = vunpack.c.h.b16 %v780
    %v803 = vunpack.c.l.b16 %v781
    %v804 = vunpack.c.h.b16 %v781
    %v805 = vunpack.c.l.b16 %v782
    %v806 = vunpack.c.h.b16 %v782
    %v807 = vunpack.c.l.b16 %v783
    %v808 = vunpack.c.h.b16 %v783
    %v809 = vunpack.c.l.b16 %v784
    %v810 = vunpack.c.h.b16 %v784
    %v811 = vunpack.c.l.b16 %v785
    %v812 = vunpack.c.h.b16 %v785
    %v813 = vpack.c.b16 %v805, %v797
    %v814 = vpack.c.b16 %v806, %v798
    %v815 = vpack.c.b16 %v807, %v799
    %v816 = vpack.c.b16 %v808, %v800
    %v817 = vpack.c.b16 %v809, %v801
    %v818 = vpack.c.b16 %v810, %v802
    %v819 = vpack.c.b16 %v811, %v803
    %v820 = vpack.c.b16 %v812, %v804
    %829 = vmatpush.bf16.xpose.msra.mxu0 0
    %830 = vmatpush.bf16.xpose.msra.mxu0 0
    %831 = vmatpush.bf16.xpose.msra.mxu0 0
    %832 = vmatpush.bf16.xpose.msra.mxu0 0
    %833 = vmatpush.bf16.xpose.msra.mxu0 0
    %834 = vmatpush.bf16.xpose.msra.mxu0 0
    %835 = vmatpush.bf16.xpose.msra.mxu0 0
    %836 = vmatpush.bf16.xpose.msra.mxu0 %v813
    %837 = vmatmul.bf16.gmra.mxu0 %v770
    %v838 = vpop.f32.mrf.mxu0
    %v839 = vadd.f32 %v787, %v838
    %v840 = vpop.f32.mrf.mxu0
    %841 = vdwg.mxu0
    %842 = vmatpush.bf16.xpose.msra.mxu0 0
    %843 = vmatpush.bf16.xpose.msra.mxu0 0
    %844 = vmatpush.bf16.xpose.msra.mxu0 0
    %845 = vmatpush.bf16.xpose.msra.mxu0 0
    %846 = vmatpush.bf16.xpose.msra.mxu0 0
    %847 = vmatpush.bf16.xpose.msra.mxu0 0
    %848 = vmatpush.bf16.xpose.msra.mxu0 0
    %849 = vmatpush.bf16.xpose.msra.mxu0 %v814
    %850 = vmatmul.bf16.gmra.mxu0 %v771
    %v851 = vpop.f32.mrf.mxu0
    %v852 = vadd.f32 %v839, %v851
    %v853 = vpop.f32.mrf.mxu0
    %854 = vdwg.mxu0
    %855 = vmatpush.bf16.xpose.msra.mxu0 0
    %856 = vmatpush.bf16.xpose.msra.mxu0 0
    %857 = vmatpush.bf16.xpose.msra.mxu0 0
    %858 = vmatpush.bf16.xpose.msra.mxu0 0
    %859 = vmatpush.bf16.xpose.msra.mxu0 0
    %860 = vmatpush.bf16.xpose.msra.mxu0 0
    %861 = vmatpush.bf16.xpose.msra.mxu0 0
    %862 = vmatpush.bf16.xpose.msra.mxu0 %v815
    %863 = vmatmul.bf16.gmra.mxu0 %v772
    %v864 = vpop.f32.mrf.mxu0
    %v865 = vadd.f32 %v852, %v864
    %v866 = vpop.f32.mrf.mxu0
    %867 = vdwg.mxu0
    %868 = vmatpush.bf16.xpose.msra.mxu0 0
    %869 = vmatpush.bf16.xpose.msra.mxu0 0
    %870 = vmatpush.bf16.xpose.msra.mxu0 0
    %871 = vmatpush.bf16.xpose.msra.mxu0 0
    %872 = vmatpush.bf16.xpose.msra.mxu0 0
    %873 = vmatpush.bf16.xpose.msra.mxu0 0
    %874 = vmatpush.bf16.xpose.msra.mxu0 0
    %875 = vmatpush.bf16.xpose.msra.mxu0 %v816
    %876 = vmatmul.bf16.gmra.mxu0 %v773
    %v877 = vpop.f32.mrf.mxu0
    %v878 = vadd.f32 %v865, %v877
    %v879 = vpop.f32.mrf.mxu0
    %880 = vdwg.mxu0
    %881 = vmatpush.bf16.xpose.msra.mxu0 0
    %882 = vmatpush.bf16.xpose.msra.mxu0 0
    %883 = vmatpush.bf16.xpose.msra.mxu0 0
    %884 = vmatpush.bf16.xpose.msra.mxu0 0
    %885 = vmatpush.bf16.xpose.msra.mxu0 0
    %886 = vmatpush.bf16.xpose.msra.mxu0 0
    %887 = vmatpush.bf16.xpose.msra.mxu0 0
    %888 = vmatpush.bf16.xpose.msra.mxu0 %v817
    %889 = vmatmul.bf16.gmra.mxu0 %v774
    %v890 = vpop.f32.mrf.mxu0
    %v891 = vadd.f32 %v878, %v890
    %v892 = vpop.f32.mrf.mxu0
    %893 = vdwg.mxu0
    %894 = vmatpush.bf16.xpose.msra.mxu0 0
    %895 = vmatpush.bf16.xpose.msra.mxu0 0
    %896 = vmatpush.bf16.xpose.msra.mxu0 0
    %897 = vmatpush.bf16.xpose.msra.mxu0 0
    %898 = vmatpush.bf16.xpose.msra.mxu0 0
    %899 = vmatpush.bf16.xpose.msra.mxu0 0
    %900 = vmatpush.bf16.xpose.msra.mxu0 0
    %901 = vmatpush.bf16.xpose.msra.mxu0 %v818
    %902 = vmatmul.bf16.gmra.mxu0 %v775
    %v903 = vpop.f32.mrf.mxu0
    %v904 = vadd.f32 %v891, %v903
    %v905 = vpop.f32.mrf.mxu0
    %906 = vdwg.mxu0
    %907 = vmatpush.bf16.xpose.msra.mxu0 0
    %908 = vmatpush.bf16.xpose.msra.mxu0 0
    %909 = vmatpush.bf16.xpose.msra.mxu0 0
    %910 = vmatpush.bf16.xpose.msra.mxu0 0
    %911 = vmatpush.bf16.xpose.msra.mxu0 0
    %912 = vmatpush.bf16.xpose.msra.mxu0 0
    %913 = vmatpush.bf16.xpose.msra.mxu0 0
    %914 = vmatpush.bf16.xpose.msra.mxu0 %v819
    %915 = vmatmul.bf16.gmra.mxu0 %v776
    %v916 = vpop.f32.mrf.mxu0
    %v917 = vadd.f32 %v904, %v916
    %v918 = vpop.f32.mrf.mxu0
    %919 = vdwg.mxu0
    %920 = vmatpush.bf16.xpose.msra.mxu0 0
    %921 = vmatpush.bf16.xpose.msra.mxu0 0
    %922 = vmatpush.bf16.xpose.msra.mxu0 0
    %923 = vmatpush.bf16.xpose.msra.mxu0 0
    %924 = vmatpush.bf16.xpose.msra.mxu0 0
    %925 = vmatpush.bf16.xpose.msra.mxu0 0
    %926 = vmatpush.bf16.xpose.msra.mxu0 0
    %927 = vmatpush.bf16.xpose.msra.mxu0 %v820
    %928 = vmatmul.bf16.gmra.mxu0 %v777
    %v929 = vpop.f32.mrf.mxu0
    %v930 = vadd.f32 %v917, %v929
    %v931 = vpop.f32.mrf.mxu0
    %932 = vdwg.mxu0
    %vm933 = vcmask 115712
    %v934 = vsel %vm933, %v930, -inf
    %935 = vmax.xlane.f32.xlu0 %v934
    %v936 = vpop.xlane.xlu0 %935
    %v937 = vsub.f32 %v930, %v936
    %v938 = vmul.f32 %v937, 1.442695
    %v939 = vpow.pop %v938
    %v940 = vsel %vm933, %v939, 0.0
    %941 = vadd.xlane.f32.xlu0 %v940
    %v942 = vpop.xlane.xlu0 %941
    %v943 = vrcp.pop %v942
    %v944 = vmul.f32 %v942, %v943
    %v945 = vsub.f32 1.0, %v944
    %v946 = vmul.f32 %v943, %v945
    %v947 = vadd.f32 %v943, %v946
    %vm948 = vweird.f32 %v942
    %vm949 = vweird.f32 %v943
    %vm950 = vmor %vm948, %vm949
    %v951 = vsel %vm950, %v943, %v947
    %v952 = vand.u32 2147483647, %v942
    %vm953 = vcmp.eq.f32.partialorder %v952, 8.507059e+37
    %v954 = vand.u32 %v942, 2147483648
    %v955 = vor.u32 1.1754944e-38, %v954
    %v956 = vsel %vm953, %v955, %v951
    %v957 = vmul.f32 %v939, %v956
    %958 = vst.msk [vmem:[#allocation2] sm:$0x3] %vm933, %v957
    // Predicated region
    $region22: #{cnn_forward.1} parent=1 // pred_check
      _
    $region23: #{cnn_forward.1} parent=1 // pred_check_branch
      %960 = sbr.rel (0) target = $region25
    $region24: #{cnn_forward.1} parent=1 // pred_region
      %962 = vsyncadd [#allocation3], 0
      %s964 = sshll.u32 [#allocation2], 4
      %s965 = int_to_ptr.vmem [resolvable:$true] %s964
      %s966 = sshll.u32 %s5, 4
      %s967 = int_to_ptr.hbm [resolvable:$true] %s966
      %969 = dma.vmem_to_hbm [thread:$0]  %s965, 32, %s967, [#allocation3]
    $region25: #{cnn_forward.1} parent=1 // pred_fallthru
      _
    // Predicated region
    $region26: #{cnn_forward.1} parent=1 // pred_check
      _
    $region27: #{cnn_forward.1} parent=1 // pred_check_branch
      %971 = sbr.rel (0) target = $region29
    $region28: #{cnn_forward.1} parent=1 // pred_region
      %973 = dma.done [#allocation3], 32
    $region29: #{cnn_forward.1} parent=1 // pred_fallthru
      _
    %974 = vsyncpa [#allocation3], 1

</llo_original>
